<compile_context>
chip_gen: v7x
topology: tpu7x:2x2x1
jax: 0.10.0
libtpu: 0.0.40
codegen_flags: <defaults>
</compile_context>

<pallas_src>
import jax
import jax.numpy as jnp
from jax.experimental import pallas as pl
from jax.experimental.pallas import tpu as pltpu


def _round_up(x, m):
    return (x + m - 1) // m * m


# ----------------------------------------------------------------------------- kernel
def sysmodel_kernel(xa_ref, w1_ref, b1_ref, w2_ref, b2_ref, w3_ref, b3_ref, out_ref):
    # xa is already bf16 (cast in the wrapper) -> straight into the MXU.
    # layer1: single K=(state+action) pass, f32 accumulation.
    h = jnp.dot(xa_ref[...], w1_ref[...], preferred_element_type=jnp.float32) + b1_ref[...]
    h = jnp.maximum(h, 0.0).astype(jnp.bfloat16)           # ReLU in f32, cast for MXU

    # layer2
    g = jnp.dot(h, w2_ref[...], preferred_element_type=jnp.float32) + b2_ref[...]
    g = jnp.maximum(g, 0.0).astype(jnp.bfloat16)

    # layer3 (no activation), lane-dense padded output (tb, 128*k) -> unmasked store.
    out = jnp.dot(g, w3_ref[...], preferred_element_type=jnp.float32) + b3_ref[...]
    out_ref[...] = out.astype(out_ref.dtype)


# ----------------------------------------------------------------------------- tiling
def _choose_batch_tile(B, batch_tile):
    """Pick the batch tile.

    Small B: one tile (grid=(1,)).  Large B: cap the tile so the 'parallel'
    batch axis has >= 2 iterations (v7x megacore can shard it across both
    TensorCores); keep tiles multiples of 8 (f32 sublane), ideally 256.
    """
    if B <= min(batch_tile, 256):
        return B
    tb = min(batch_tile, _round_up(pl.cdiv(B, 2), 256))
    return max(8, _round_up(tb, 8))


# ----------------------------------------------------------------------------- wrapper
def sysmodel_forward(state, action, params, *, batch_tile=2048):
    """Pallas SysModel forward.  Returns next-state prediction (B, state_size)."""
    B, S = state.shape
    A = action.shape[1]
    w1, b1 = params["w1"], params["b1"]
    w2, b2 = params["w2"], params["b2"]
    w3, b3 = params["w3"], params["b3"]
    in_dim = w1.shape[0]
    L1p, L2p, OUTp = w1.shape[1], w2.shape[1], w3.shape[1]
    assert in_dim == S + A

    # Concatenate + cast once in the wrapper: halves the per-row input DMA and
    # removes the in-kernel f32->bf16 pack (expensive path on v5e).
    xa = jnp.concatenate([state, action], axis=1).astype(jnp.bfloat16)

    tb = _choose_batch_tile(B, batch_tile)
    grid = (pl.cdiv(B, tb),)

    const2 = lambda i: (0, 0)                    # weights/biases resident across batch tiles
    in_specs = [
        pl.BlockSpec((tb, in_dim), lambda i: (i, 0)),  # xa tile (bf16)
        pl.BlockSpec(w1.shape, const2),
        pl.BlockSpec(b1.shape, const2),
        pl.BlockSpec(w2.shape, const2),
        pl.BlockSpec(b2.shape, const2),
        pl.BlockSpec(w3.shape, const2),
        pl.BlockSpec(b3.shape, const2),
    ]
    out_specs = pl.BlockSpec((tb, OUTp), lambda i: (i, 0))  # lane-dense (128-wide) output

    weight_bytes = sum(int(p.size) * p.dtype.itemsize
                       for p in (w1, b1, w2, b2, w3, b3))
    # Live-set estimate: double-buffered weights + bf16 input tile + f32 padded
    # output tile + f32/bf16 hidden activations; + slack.  Capped for v7x (64 MiB).
    vmem_bytes = int(
        2 * weight_bytes
        + 2 * tb * in_dim * 2
        + 2 * tb * OUTp * 4
        + tb * L1p * (4 + 2)
        + tb * L2p * (4 + 2)
    ) + (8 << 20)
    vmem_limit = min(vmem_bytes, 64 << 20)

    flops = int(2 * B * (in_dim * L1p + L1p * L2p + L2p * OUTp))
    bytes_accessed = int(xa.size * 2 + B * OUTp * 4 + weight_bytes)

    out_full = pl.pallas_call(
        sysmodel_kernel,
        out_shape=jax.ShapeDtypeStruct((B, OUTp), jnp.float32),
        grid_spec=pltpu.PrefetchScalarGridSpec(
            num_scalar_prefetch=0,
            grid=grid,
            in_specs=in_specs,
            out_specs=out_specs,
        ),
        compiler_params=pltpu.CompilerParams(
            dimension_semantics=("parallel",),
            vmem_limit_bytes=vmem_limit),
        cost_estimate=pl.CostEstimate(
            flops=flops, transcendentals=0, bytes_accessed=bytes_accessed),
    )(xa, w1, b1, w2, b2, w3, b3)

    # Strip the zero-padded output lanes (exact: padded w3/b3 columns are zero).
    return out_full[:, :S]


# ----------------------------------------------------------------------------- params
def init_sysmodel_params(key, state_size, action_size,
                         layer1_size=400, layer2_size=300):
    """torch.nn.Linear-style init (U[-1/sqrt(fan_in), +]).

    Hidden widths and the output width are zero-padded to multiples of 128 for
    lane-dense MXU tiles and unmasked stores (400 -> 512, 300 -> 384,
    state_size -> 128).  Padding is mathematically exact (padded weights/biases
    are zero).  Returns (params_bf16, params_f32): bf16 weights for the kernel
    plus the unpadded f32 originals for reference checking.
    """
    L1p = _round_up(layer1_size, 128)
    L2p = _round_up(layer2_size, 128)
    OUTp = _round_up(state_size, 128)
    in_dim = state_size + action_size

    def linear(k, fan_in, fan_out, pad_in, pad_out):
        kw, kb = jax.random.split(k)
        bound = 1.0 / (float(fan_in) ** 0.5)
        w = jax.random.uniform(kw, (fan_in, fan_out), jnp.float32, -bound, bound)
        b = jax.random.uniform(kb, (1, fan_out), jnp.float32, -bound, bound)
        wp = jnp.pad(w, ((0, pad_in - fan_in), (0, pad_out - fan_out)))
        bp = jnp.pad(b, ((0, 0), (0, pad_out - fan_out)))
        return w, b, wp, bp

    k1, k2, k3 = jax.random.split(key, 3)
    w1, b1, w1p, b1p = linear(k1, in_dim, layer1_size, in_dim, L1p)
    w2, b2, w2p, b2p = linear(k2, layer1_size, layer2_size, L1p, L2p)
    w3, b3, w3p, b3p = linear(k3, layer2_size, state_size, L2p, OUTp)

    params_f32 = {"w1": w1, "b1": b1, "w2": w2, "b2": b2, "w3": w3, "b3": b3}
    params_kernel = {
        "w1": w1p.astype(jnp.bfloat16), "b1": b1p,
        "w2": w2p.astype(jnp.bfloat16), "b2": b2p,
        "w3": w3p.astype(jnp.bfloat16), "b3": b3p,
    }
    return params_kernel, params_f32


# ----------------------------------------------------------------------------- references
def sysmodel_reference_f32(state, action, p32):
    """Pure-f32 reference matching the PyTorch module semantics."""
    xa = jnp.concatenate([state, action], axis=1)
    h = jnp.maximum(xa @ p32["w1"] + p32["b1"], 0.0)
    h = jnp.maximum(h @ p32["w2"] + p32["b2"], 0.0)
    return h @ p32["w3"] + p32["b3"]


def sysmodel_reference_bf16(state, action, p, state_size):
    """Reference mirroring the kernel's bf16-operand / f32-accumulate numerics."""
    xa = jnp.concatenate([state, action], axis=1).astype(jnp.bfloat16)
    h = jnp.dot(xa, p["w1"], preferred_element_type=jnp.float32) + p["b1"]
    h = jnp.maximum(h, 0.0).astype(jnp.bfloat16)
    g = jnp.dot(h, p["w2"], preferred_element_type=jnp.float32) + p["b2"]
    g = jnp.maximum(g, 0.0).astype(jnp.bfloat16)
    out = jnp.dot(g, p["w3"], preferred_element_type=jnp.float32) + p["b3"]
    return out[:, :state_size]


# ----------------------------------------------------------------------------- demo
if __name__ == "__main__":
    batch = 8
    state_size = 24
    action_size = 8
    layer1_size = 400   # module default (padded to 512 internally)
    layer2_size = 300   # module default (padded to 384 internally)

    key = jax.random.PRNGKey(0)
    kparams, kstate, kaction = jax.random.split(key, 3)

    params, params_f32 = init_sysmodel_params(
        kparams, state_size, action_size, layer1_size, layer2_size)
    state = jax.random.normal(kstate, (batch, state_size), jnp.float32)
    action = jax.random.normal(kaction, (batch, action_size), jnp.float32)

    out = sysmodel_forward(state, action, params)
    out = jax.block_until_ready(out)
    assert out.shape == (batch, state_size)

    # Tight check vs. a reference with identical bf16/f32 numerics.
    ref_bf16 = sysmodel_reference_bf16(state, action, params, state_size)
    assert jnp.allclose(out, ref_bf16, atol=1e-3, rtol=1e-3), "bf16-mirror mismatch"

    # Loose check vs. the pure-f32 module semantics (bf16 weight rounding).
    ref_f32 = sysmodel_reference_f32(state, action, params_f32)
    assert jnp.allclose(out, ref_f32, atol=5e-2, rtol=5e-2), "f32 reference mismatch"

    print("KERNEL_OK")
</pallas_src>

<mosaic_0001>
module attributes {stable_mosaic.version = 11 : i64} {
  func.func @sysmodel_kernel(%arg0: i32, %arg1: memref<8x32xbf16, #tpu.memory_space<vmem>>, %arg2: memref<32x512xbf16, #tpu.memory_space<vmem>>, %arg3: memref<1x512xf32, #tpu.memory_space<vmem>>, %arg4: memref<512x384xbf16, #tpu.memory_space<vmem>>, %arg5: memref<1x384xf32, #tpu.memory_space<vmem>>, %arg6: memref<384x128xbf16, #tpu.memory_space<vmem>>, %arg7: memref<1x128xf32, #tpu.memory_space<vmem>>, %arg8: memref<8x128xf32, #tpu.memory_space<vmem>>) attributes {dimension_semantics = [#tpu.dimension_semantics<parallel>], iteration_bounds = array<i64: 1>, scalar_prefetch = 0 : i64, scratch_operands = 0 : i64, tpu.core_type = #tpu.core_type<tc>, window_params = [{transform_indices = @transform_0, window_bounds = array<i64: 8, 32>}, {pipeline_mode = #tpu.pipeline_mode<synchronous>, transform_indices = @transform_1, window_bounds = array<i64: 32, 512>}, {pipeline_mode = #tpu.pipeline_mode<synchronous>, transform_indices = @transform_2, window_bounds = array<i64: 1, 512>}, {pipeline_mode = #tpu.pipeline_mode<synchronous>, transform_indices = @transform_3, window_bounds = array<i64: 512, 384>}, {pipeline_mode = #tpu.pipeline_mode<synchronous>, transform_indices = @transform_4, window_bounds = array<i64: 1, 384>}, {pipeline_mode = #tpu.pipeline_mode<synchronous>, transform_indices = @transform_5, window_bounds = array<i64: 384, 128>}, {pipeline_mode = #tpu.pipeline_mode<synchronous>, transform_indices = @transform_6, window_bounds = array<i64: 1, 128>}, {transform_indices = @transform_7, window_bounds = array<i64: 8, 128>}]} {
    %c0 = arith.constant 0 : index
    %c0_0 = arith.constant 0 : index
    %0 = vector.load %arg1[%c0, %c0_0] : memref<8x32xbf16, #tpu.memory_space<vmem>>, vector<8x32xbf16>
    %c0_1 = arith.constant 0 : index
    %c0_2 = arith.constant 0 : index
    %1 = vector.load %arg2[%c0_1, %c0_2] : memref<32x512xbf16, #tpu.memory_space<vmem>>, vector<32x512xbf16>
    %cst = arith.constant dense<0.000000e+00> : vector<8x512xf32>
    %2 = tpu.matmul %0, %1, %cst {dimension_numbers = #tpu.dot_dimension_numbers<[1], [0], [0], [1], [0, 0, 1, 1], [], []>} : vector<8x32xbf16>, vector<32x512xbf16>, vector<8x512xf32> -> vector<8x512xf32>
    %c0_3 = arith.constant 0 : index
    %c0_4 = arith.constant 0 : index
    %3 = vector.load %arg3[%c0_3, %c0_4] : memref<1x512xf32, #tpu.memory_space<vmem>>, vector<1x512xf32>
    %4 = vector.broadcast %3 : vector<1x512xf32> to vector<8x512xf32>
    %5 = arith.addf %2, %4 : vector<8x512xf32>
    %cst_5 = arith.constant 0.000000e+00 : f32
    %6 = vector.broadcast %cst_5 : f32 to vector<8x512xf32>
    %7 = arith.maximumf %5, %6 : vector<8x512xf32>
    %8 = arith.truncf %7 : vector<8x512xf32> to vector<8x512xbf16>
    %c0_6 = arith.constant 0 : index
    %c0_7 = arith.constant 0 : index
    %9 = vector.load %arg4[%c0_6, %c0_7] : memref<512x384xbf16, #tpu.memory_space<vmem>>, vector<512x384xbf16>
    %cst_8 = arith.constant dense<0.000000e+00> : vector<8x384xf32>
    %10 = tpu.matmul %8, %9, %cst_8 {dimension_numbers = #tpu.dot_dimension_numbers<[1], [0], [0], [1], [0, 0, 1, 1], [], []>} : vector<8x512xbf16>, vector<512x384xbf16>, vector<8x384xf32> -> vector<8x384xf32>
    %c0_9 = arith.constant 0 : index
    %c0_10 = arith.constant 0 : index
    %11 = vector.load %arg5[%c0_9, %c0_10] : memref<1x384xf32, #tpu.memory_space<vmem>>, vector<1x384xf32>
    %12 = vector.broadcast %11 : vector<1x384xf32> to vector<8x384xf32>
    %13 = arith.addf %10, %12 : vector<8x384xf32>
    %cst_11 = arith.constant 0.000000e+00 : f32
    %14 = vector.broadcast %cst_11 : f32 to vector<8x384xf32>
    %15 = arith.maximumf %13, %14 : vector<8x384xf32>
    %16 = arith.truncf %15 : vector<8x384xf32> to vector<8x384xbf16>
    %c0_12 = arith.constant 0 : index
    %c0_13 = arith.constant 0 : index
    %17 = vector.load %arg6[%c0_12, %c0_13] : memref<384x128xbf16, #tpu.memory_space<vmem>>, vector<384x128xbf16>
    %cst_14 = arith.constant dense<0.000000e+00> : vector<8x128xf32>
    %18 = tpu.matmul %16, %17, %cst_14 {dimension_numbers = #tpu.dot_dimension_numbers<[1], [0], [0], [1], [0, 0, 1, 1], [], []>} : vector<8x384xbf16>, vector<384x128xbf16>, vector<8x128xf32> -> vector<8x128xf32>
    %c0_15 = arith.constant 0 : index
    %c0_16 = arith.constant 0 : index
    %19 = vector.load %arg7[%c0_15, %c0_16] : memref<1x128xf32, #tpu.memory_space<vmem>>, vector<1x128xf32>
    %20 = vector.broadcast %19 : vector<1x128xf32> to vector<8x128xf32>
    %21 = arith.addf %18, %20 : vector<8x128xf32>
    %c0_17 = arith.constant 0 : index
    %c0_18 = arith.constant 0 : index
    %22 = vector.load %arg8[%c0_17, %c0_18] : memref<8x128xf32, #tpu.memory_space<vmem>>, vector<8x128xf32>
    tpu.vector_store %arg8[%c0_17, %c0_18], %21 {strides = array<i32>} : memref<8x128xf32, #tpu.memory_space<vmem>>, vector<8x128xf32>,
    return
  }
  func.func @transform_0(%arg0: i32) -> (i32, i32) {
    %c0_i32 = arith.constant 0 : i32
    %c0_i32_0 = arith.constant 0 : i32
    return %arg0, %c0_i32 : i32, i32
  }
  func.func @transform_1(%arg0: i32) -> (i32, i32) {
    %c0_i32 = arith.constant 0 : i32
    %c0_i32_0 = arith.constant 0 : i32
    %c0_i32_1 = arith.constant 0 : i32
    return %c0_i32, %c0_i32_0 : i32, i32
  }
  func.func @transform_2(%arg0: i32) -> (i32, i32) {
    %c0_i32 = arith.constant 0 : i32
    %c0_i32_0 = arith.constant 0 : i32
    %c0_i32_1 = arith.constant 0 : i32
    return %c0_i32, %c0_i32_0 : i32, i32
  }
  func.func @transform_3(%arg0: i32) -> (i32, i32) {
    %c0_i32 = arith.constant 0 : i32
    %c0_i32_0 = arith.constant 0 : i32
    %c0_i32_1 = arith.constant 0 : i32
    return %c0_i32, %c0_i32_0 : i32, i32
  }
  func.func @transform_4(%arg0: i32) -> (i32, i32) {
    %c0_i32 = arith.constant 0 : i32
    %c0_i32_0 = arith.constant 0 : i32
    %c0_i32_1 = arith.constant 0 : i32
    return %c0_i32, %c0_i32_0 : i32, i32
  }
  func.func @transform_5(%arg0: i32) -> (i32, i32) {
    %c0_i32 = arith.constant 0 : i32
    %c0_i32_0 = arith.constant 0 : i32
    %c0_i32_1 = arith.constant 0 : i32
    return %c0_i32, %c0_i32_0 : i32, i32
  }
  func.func @transform_6(%arg0: i32) -> (i32, i32) {
    %c0_i32 = arith.constant 0 : i32
    %c0_i32_0 = arith.constant 0 : i32
    %c0_i32_1 = arith.constant 0 : i32
    return %c0_i32, %c0_i32_0 : i32, i32
  }
  func.func @transform_7(%arg0: i32) -> (i32, i32) {
    %c0_i32 = arith.constant 0 : i32
    %c0_i32_0 = arith.constant 0 : i32
    return %arg0, %c0_i32 : i32, i32
  }
}

</mosaic_0001>

<llo_original>
// kernel: tpu_custom_call.1
$region0: #{tpu_custom_call.1}
  #allocation0 [shape = 'u32[]', space=smem, size = 0x4, offset = 0x4, fixed_abs, tag = 'smem constant byte address 0x4 - core index']
  #allocation1 [shape = 'u32[144,128]{1,0:T(1,128)}', space=vmem, size = 0x12000, scoped, tag = 'internal scratch']
  %s0 = inlined_call_operand.hbm [shape: bf16[8,32], index: 0, kind: input, shape index: {}]
  %s1 = inlined_call_operand.hbm [shape: bf16[32,512], index: 1, kind: input, shape index: {}]
  %s2 = inlined_call_operand.vmem [shape: f32[1,512], index: 2, kind: input, shape index: {}]
  %s3 = inlined_call_operand.hbm [shape: bf16[512,384], index: 3, kind: input, shape index: {}]
  %s4 = inlined_call_operand.vmem [shape: f32[1,384], index: 4, kind: input, shape index: {}]
  %s5 = inlined_call_operand.hbm [shape: bf16[384,128], index: 5, kind: input, shape index: {}]
  %s6 = inlined_call_operand.vmem [shape: f32[1,128], index: 6, kind: input, shape index: {}]
  %s7 = inlined_call_operand.hbm [shape: f32[8,128], index: 7, kind: output, shape index: {}]
  %s8 = sld [smem:[#allocation0]]
  $region54: #{tpu_custom_call.1} parent=0
    _
  %s10 = ssub.s32 1, %s8
  %s11 = scalar_select 0, %s10, %s8
  $region1: #{tpu_custom_call.1} parent=0
    #allocation2 [shape = 'u8[2048]{0}', space=vmem, size = 0x800, scoped, tag = 'input window, operand 0, single buffered']
    #allocation3 [shape = 's32[1]{0}', space=sflag, size = 0x4, scoped, tag = 'scoped memory for tpu_custom_call.1']
    #allocation4 [shape = 's32[1]{0}', space=sflag, size = 0x4, scoped, tag = 'scoped memory for tpu_custom_call.1']
    #allocation5 [shape = 'u8[32768]{0}', space=vmem, size = 0x8000, scoped, tag = 'input window, operand 1, single buffered']
    #allocation6 [shape = 's32[1]{0}', space=sflag, size = 0x4, scoped, tag = 'scoped memory for tpu_custom_call.1']
    #allocation7 [shape = 'u8[393216]{0}', space=vmem, size = 0x60000, scoped, tag = 'input window, operand 3, single buffered']
    #allocation8 [shape = 'u8[98304]{0}', space=vmem, size = 0x18000, scoped, tag = 'input window, operand 5, single buffered']
    #allocation9 [shape = 's32[1]{0}', space=sflag, size = 0x4, scoped, tag = 'scoped memory for tpu_custom_call.1']
    #allocation10 [shape = 'u8[4096]{0}', space=vmem, size = 0x1000, scoped, tag = 'output window, operand 0, single buffered']
    %12 = vsyncpa [#allocation3], 0
    %13 = vsyncpa [#allocation6], 0
    %14 = vsyncpa [#allocation9], 0
    %15 = vsyncpa [#allocation4], 0
    // Predicated region
    $region2: #{tpu_custom_call.1} parent=1 // pred_check
      _
    $region3: #{tpu_custom_call.1} parent=1 // pred_check_branch
      %17 = sbr.rel (0) target = $region5
    $region4: #{tpu_custom_call.1} parent=1 // pred_region
      %s19 = ssub.s32 64, 64
      %20 = vsyncadd [#allocation3], %s19
      %s22 = sshll.u32 [#allocation2], 4
      %s23 = int_to_ptr.vmem [resolvable:$true] %s22
      %25 = dma.hbm_to_vmem [thread:$0]  %s0, 64, %s23, [#allocation3]
    $region5: #{tpu_custom_call.1} parent=1 // pred_fallthru
      _
    // Predicated region
    $region6: #{tpu_custom_call.1} parent=1 // pred_check
      _
    $region7: #{tpu_custom_call.1} parent=1 // pred_check_branch
      %27 = sbr.rel (0) target = $region9
    $region8: #{tpu_custom_call.1} parent=1 // pred_region
      %s29 = ssub.s32 1024, 1024
      %30 = vsyncadd [#allocation6], %s29
      %s31 = sshll.u32 [#allocation5], 4
      %s32 = int_to_ptr.vmem [resolvable:$true] %s31
      %37 = dma.hbm_to_vmem [thread:$0]  %s1, 1024, %s32, [#allocation6], 256, 256, 16
    $region9: #{tpu_custom_call.1} parent=1 // pred_fallthru
      _
    // Predicated region
    $region10: #{tpu_custom_call.1} parent=1 // pred_check
      _
    $region11: #{tpu_custom_call.1} parent=1 // pred_check_branch
      %39 = sbr.rel (0) target = $region13
    $region12: #{tpu_custom_call.1} parent=1 // pred_region
      _
    $region13: #{tpu_custom_call.1} parent=1 // pred_fallthru
      _
    // Predicated region
    $region14: #{tpu_custom_call.1} parent=1 // pred_check
      _
    $region15: #{tpu_custom_call.1} parent=1 // pred_check_branch
      %41 = sbr.rel (0) target = $region17
    $region16: #{tpu_custom_call.1} parent=1 // pred_region
      %s43 = ssub.s32 12288, 12288
      %44 = vsyncadd [#allocation6], %s43
      %s45 = sshll.u32 [#allocation7], 4
      %s46 = int_to_ptr.vmem [resolvable:$true] %s45
      %51 = dma.hbm_to_vmem [thread:$0]  %s3, 12288, %s46, [#allocation6], 192, 192, 12
    $region17: #{tpu_custom_call.1} parent=1 // pred_fallthru
      _
    // Predicated region
    $region18: #{tpu_custom_call.1} parent=1 // pred_check
      _
    $region19: #{tpu_custom_call.1} parent=1 // pred_check_branch
      %53 = sbr.rel (0) target = $region21
    $region20: #{tpu_custom_call.1} parent=1 // pred_region
      _
    $region21: #{tpu_custom_call.1} parent=1 // pred_fallthru
      _
    // Predicated region
    $region22: #{tpu_custom_call.1} parent=1 // pred_check
      _
    $region23: #{tpu_custom_call.1} parent=1 // pred_check_branch
      %55 = sbr.rel (0) target = $region25
    $region24: #{tpu_custom_call.1} parent=1 // pred_region
      %s57 = ssub.s32 3072, 3072
      %58 = vsyncadd [#allocation9], %s57
      %s59 = sshll.u32 [#allocation8], 4
      %s60 = int_to_ptr.vmem [resolvable:$true] %s59
      %65 = dma.hbm_to_vmem [thread:$0]  %s5, 3072, %s60, [#allocation9], 64, 64, 4
    $region25: #{tpu_custom_call.1} parent=1 // pred_fallthru
      _
    // Predicated region
    $region26: #{tpu_custom_call.1} parent=1 // pred_check
      _
    $region27: #{tpu_custom_call.1} parent=1 // pred_check_branch
      %67 = sbr.rel (0) target = $region29
    $region28: #{tpu_custom_call.1} parent=1 // pred_region
      _
    $region29: #{tpu_custom_call.1} parent=1 // pred_fallthru
      _
    // Predicated region
    $region30: #{tpu_custom_call.1} parent=1 // pred_check
      _
    $region31: #{tpu_custom_call.1} parent=1 // pred_check_branch
      %69 = sbr.rel (0) target = $region33
    $region32: #{tpu_custom_call.1} parent=1 // pred_region
      %70 = dma.done [#allocation3], 64
    $region33: #{tpu_custom_call.1} parent=1 // pred_fallthru
      _
    // Predicated region
    $region34: #{tpu_custom_call.1} parent=1 // pred_check
      _
    $region35: #{tpu_custom_call.1} parent=1 // pred_check_branch
      %72 = sbr.rel (0) target = $region37
    $region36: #{tpu_custom_call.1} parent=1 // pred_region
      %73 = dma.done [#allocation6], 1024
    $region37: #{tpu_custom_call.1} parent=1 // pred_fallthru
      _
    // Predicated region
    $region38: #{tpu_custom_call.1} parent=1 // pred_check
      _
    $region39: #{tpu_custom_call.1} parent=1 // pred_check_branch
      %75 = sbr.rel (0) target = $region41
    $region40: #{tpu_custom_call.1} parent=1 // pred_region
      %76 = dma.done [#allocation6], 12288
    $region41: #{tpu_custom_call.1} parent=1 // pred_fallthru
      _
    // Predicated region
    $region42: #{tpu_custom_call.1} parent=1 // pred_check
      _
    $region43: #{tpu_custom_call.1} parent=1 // pred_check_branch
      %78 = sbr.rel (0) target = $region45
    $region44: #{tpu_custom_call.1} parent=1 // pred_region
      %79 = dma.done [#allocation9], 3072
    $region45: #{tpu_custom_call.1} parent=1 // pred_fallthru
      _
    %v81 = vld [vmem:[#allocation2] sm:$0xf]
    %v82 = vld [vmem:[#allocation5] sm:$0xff]
    %v83 = vld [vmem:[#allocation5 + $0x8] sm:$0xff]
    %v84 = vld [vmem:[#allocation5 + $0x10] sm:$0xff]
    %v85 = vld [vmem:[#allocation5 + $0x18] sm:$0xff]
    %v86 = vld [vmem:[#allocation5 + $0x20] sm:$0xff]
    %v87 = vld [vmem:[#allocation5 + $0x28] sm:$0xff]
    %v88 = vld [vmem:[#allocation5 + $0x30] sm:$0xff]
    %v89 = vld [vmem:[#allocation5 + $0x38] sm:$0xff]
    %v90 = vld [vmem:[%s2] sm:$0xf]
    %v92 = vlaneseq
    %v93 = vshrl.u32 %v92, 7
    %v94 = vsub.s32 0, %v93
    %v95 = vrot.slane %v90, %v94
    %v96 = vlaneseq
    %v97 = vshrl.u32 %v96, 7
    %v98 = vsub.s32 1, %v97
    %v99 = vrot.slane %v90, %v98
    %v100 = vlaneseq
    %v101 = vshrl.u32 %v100, 7
    %v102 = vsub.s32 2, %v101
    %v103 = vrot.slane %v90, %v102
    %v104 = vlaneseq
    %v105 = vshrl.u32 %v104, 7
    %v106 = vsub.s32 3, %v105
    %v107 = vrot.slane %v90, %v106
    %v120 = vunpack.c.l.b16 %v82
    %v121 = vunpack.c.h.b16 %v82
    %v122 = vunpack.c.l.b16 %v83
    %v123 = vunpack.c.h.b16 %v83
    %v124 = vunpack.c.l.b16 %v84
    %v125 = vunpack.c.h.b16 %v84
    %v126 = vunpack.c.l.b16 %v85
    %v127 = vunpack.c.h.b16 %v85
    %v128 = vunpack.c.l.b16 %v86
    %v129 = vunpack.c.h.b16 %v86
    %v130 = vunpack.c.l.b16 %v87
    %v131 = vunpack.c.h.b16 %v87
    %v132 = vunpack.c.l.b16 %v88
    %v133 = vunpack.c.h.b16 %v88
    %v134 = vunpack.c.l.b16 %v89
    %v135 = vunpack.c.h.b16 %v89
    %v136 = vpack.c.b16 %v124, %v120
    %v137 = vpack.c.b16 %v125, %v121
    %v138 = vpack.c.b16 %v126, %v122
    %v139 = vpack.c.b16 %v127, %v123
    %v140 = vpack.c.b16 %v132, %v128
    %v141 = vpack.c.b16 %v133, %v129
    %v142 = vpack.c.b16 %v134, %v130
    %v143 = vpack.c.b16 %v135, %v131
    %vm152 = vcmask 261120
    %v154 = vsel %vm152, %v81, 0
    %156 = vmatprep.subr.bf16.mxu0 %v137
    %157 = vmatpush1.bf16.msra.mxu0 %v136
    %158 = vmatprep.subr.bf16.mxu0 %v141
    %159 = vmatpush1.bf16.msra.mxu0 %v140
    %160 = vmatprep.subr.bf16.mxu0 0
    %161 = vmatpush1.bf16.msra.mxu0 0
    %162 = vmatprep.subr.bf16.mxu0 0
    %163 = vmatpush1.bf16.msra.mxu0 0
    %164 = vmatprep.subr.bf16.mxu0 0
    %165 = vmatpush1.bf16.msra.mxu0 0
    %166 = vmatprep.subr.bf16.mxu0 0
    %167 = vmatpush1.bf16.msra.mxu0 0
    %168 = vmatprep.subr.bf16.mxu0 0
    %169 = vmatpush1.bf16.msra.mxu0 0
    %170 = vmatprep.subr.bf16.mxu0 0
    %171 = vmatpush1.bf16.msra.mxu0 0
    %172 = vmatprep.subr.bf16.mxu0 0
    %173 = vmatpush1.bf16.msra.mxu0 0
    %174 = vmatprep.subr.bf16.mxu0 0
    %175 = vmatpush1.bf16.msra.mxu0 0
    %176 = vmatprep.subr.bf16.mxu0 0
    %177 = vmatpush1.bf16.msra.mxu0 0
    %178 = vmatprep.subr.bf16.mxu0 0
    %179 = vmatpush1.bf16.msra.mxu0 0
    %180 = vmatprep.subr.bf16.mxu0 0
    %181 = vmatpush1.bf16.msra.mxu0 0
    %182 = vmatprep.subr.bf16.mxu0 0
    %183 = vmatpush1.bf16.msra.mxu0 0
    %184 = vmatprep.subr.bf16.mxu0 0
    %185 = vmatpush1.bf16.msra.mxu0 0
    %186 = vmatprep.subr.bf16.mxu0 0
    %187 = vmatpush1.bf16.msra.mxu0 0
    %188 = vmatprep.mubr.bf16.mxu0 0
    %189 = vmatmul.mubr.bf16.gmra.mrb[0].mxu0 %v154
    %v190 = vpop.f32.mrb[0].mxu0
    %v191 = vadd.f32 %v95, %v190
    %v192 = vpop.f32.mrb[0].mxu0
    %v193 = vadd.f32 %v99, %v192
    %v194 = vpop.f32.mrb[0].mxu0
    %v195 = vpop.f32.mrb[0].mxu0
    %196 = vdwg.mxu0
    %197 = vmatprep.subr.bf16.mxu0 %v139
    %198 = vmatpush1.bf16.msra.mxu0 %v138
    %199 = vmatprep.subr.bf16.mxu0 %v143
    %200 = vmatpush1.bf16.msra.mxu0 %v142
    %201 = vmatprep.subr.bf16.mxu0 0
    %202 = vmatpush1.bf16.msra.mxu0 0
    %203 = vmatprep.subr.bf16.mxu0 0
    %204 = vmatpush1.bf16.msra.mxu0 0
    %205 = vmatprep.subr.bf16.mxu0 0
    %206 = vmatpush1.bf16.msra.mxu0 0
    %207 = vmatprep.subr.bf16.mxu0 0
    %208 = vmatpush1.bf16.msra.mxu0 0
    %209 = vmatprep.subr.bf16.mxu0 0
    %210 = vmatpush1.bf16.msra.mxu0 0
    %211 = vmatprep.subr.bf16.mxu0 0
    %212 = vmatpush1.bf16.msra.mxu0 0
    %213 = vmatprep.subr.bf16.mxu0 0
    %214 = vmatpush1.bf16.msra.mxu0 0
    %215 = vmatprep.subr.bf16.mxu0 0
    %216 = vmatpush1.bf16.msra.mxu0 0
    %217 = vmatprep.subr.bf16.mxu0 0
    %218 = vmatpush1.bf16.msra.mxu0 0
    %219 = vmatprep.subr.bf16.mxu0 0
    %220 = vmatpush1.bf16.msra.mxu0 0
    %221 = vmatprep.subr.bf16.mxu0 0
    %222 = vmatpush1.bf16.msra.mxu0 0
    %223 = vmatprep.subr.bf16.mxu0 0
    %224 = vmatpush1.bf16.msra.mxu0 0
    %225 = vmatprep.subr.bf16.mxu0 0
    %226 = vmatpush1.bf16.msra.mxu0 0
    %227 = vmatprep.subr.bf16.mxu0 0
    %228 = vmatpush1.bf16.msra.mxu0 0
    %229 = vmatprep.mubr.bf16.mxu0 0
    %230 = vmatmul.mubr.bf16.gmra.mrb[0].mxu0 %v154
    %v231 = vpop.f32.mrb[0].mxu0
    %v232 = vadd.f32 %v103, %v231
    %v233 = vpop.f32.mrb[0].mxu0
    %v234 = vadd.f32 %v107, %v233
    %v235 = vpop.f32.mrb[0].mxu0
    %v236 = vpop.f32.mrb[0].mxu0
    %237 = vdwg.mxu0
    %v238 = vmax.f32 %v191, 0.0
    %v239 = vmax.f32 %v193, 0.0
    %v240 = vmax.f32 %v232, 0.0
    %v241 = vmax.f32 %v234, 0.0
    %v242 = vpack.c.bf16 %v238, %v238
    %v243 = vpack.c.bf16 %v239, %v239
    %v244 = vpack.c.bf16 %v240, %v240
    %v245 = vpack.c.bf16 %v241, %v241
    %v246 = vld [vmem:[#allocation7] sm:$0xff]
    %v247 = vld [vmem:[#allocation7 + $0x8] sm:$0xf]
    %v248 = vld [vmem:[#allocation7 + $0xc] sm:$0xff]
    %v249 = vld [vmem:[#allocation7 + $0x14] sm:$0xf]
    %v250 = vld [vmem:[#allocation7 + $0x18] sm:$0xff]
    %v251 = vld [vmem:[#allocation7 + $0x20] sm:$0xf]
    %v252 = vld [vmem:[#allocation7 + $0x24] sm:$0xff]
    %v253 = vld [vmem:[#allocation7 + $0x2c] sm:$0xf]
    %v254 = vld [vmem:[#allocation7 + $0x30] sm:$0xff]
    %v255 = vld [vmem:[#allocation7 + $0x38] sm:$0xf]
    %v256 = vld [vmem:[#allocation7 + $0x3c] sm:$0xff]
    %v257 = vld [vmem:[#allocation7 + $0x44] sm:$0xf]
    %v258 = vld [vmem:[#allocation7 + $0x48] sm:$0xff]
    %v259 = vld [vmem:[#allocation7 + $0x50] sm:$0xf]
    %v260 = vld [vmem:[#allocation7 + $0x54] sm:$0xff]
    %v261 = vld [vmem:[#allocation7 + $0x5c] sm:$0xf]
    %v262 = vld [vmem:[#allocation7 + $0x60] sm:$0xff]
    %v263 = vld [vmem:[#allocation7 + $0x68] sm:$0xf]
    %v264 = vld [vmem:[#allocation7 + $0x6c] sm:$0xff]
    %v265 = vld [vmem:[#allocation7 + $0x74] sm:$0xf]
    %v266 = vld [vmem:[#allocation7 + $0x78] sm:$0xff]
    %v267 = vld [vmem:[#allocation7 + $0x80] sm:$0xf]
    %v268 = vld [vmem:[#allocation7 + $0x84] sm:$0xff]
    %v269 = vld [vmem:[#allocation7 + $0x8c] sm:$0xf]
    %v270 = vld [vmem:[#allocation7 + $0x90] sm:$0xff]
    %v271 = vld [vmem:[#allocation7 + $0x98] sm:$0xf]
    %v272 = vld [vmem:[#allocation7 + $0x9c] sm:$0xff]
    %v273 = vld [vmem:[#allocation7 + $0xa4] sm:$0xf]
    %v274 = vld [vmem:[#allocation7 + $0xa8] sm:$0xff]
    %v275 = vld [vmem:[#allocation7 + $0xb0] sm:$0xf]
    %v276 = vld [vmem:[#allocation7 + $0xb4] sm:$0xff]
    %v277 = vld [vmem:[#allocation7 + $0xbc] sm:$0xf]
    %v278 = vld [vmem:[#allocation7 + $0xc0] sm:$0xff]
    %v279 = vld [vmem:[#allocation7 + $0xc8] sm:$0xf]
    %v280 = vld [vmem:[#allocation7 + $0xcc] sm:$0xff]
    %v281 = vld [vmem:[#allocation7 + $0xd4] sm:$0xf]
    %v282 = vld [vmem:[#allocation7 + $0xd8] sm:$0xff]
    %v283 = vld [vmem:[#allocation7 + $0xe0] sm:$0xf]
    %v284 = vld [vmem:[#allocation7 + $0xe4] sm:$0xff]
    %v285 = vld [vmem:[#allocation7 + $0xec] sm:$0xf]
    %v286 = vld [vmem:[#allocation7 + $0xf0] sm:$0xff]
    %v287 = vld [vmem:[#allocation7 + $0xf8] sm:$0xf]
    %v288 = vld [vmem:[#allocation7 + $0xfc] sm:$0xff]
    %v289 = vld [vmem:[#allocation7 + $0x104] sm:$0xf]
    %v290 = vld [vmem:[#allocation7 + $0x108] sm:$0xff]
    %v291 = vld [vmem:[#allocation7 + $0x110] sm:$0xf]
    %v292 = vld [vmem:[#allocation7 + $0x114] sm:$0xff]
    %v293 = vld [vmem:[#allocation7 + $0x11c] sm:$0xf]
    %v294 = vld [vmem:[#allocation7 + $0x120] sm:$0xff]
    %v295 = vld [vmem:[#allocation7 + $0x128] sm:$0xf]
    %v296 = vld [vmem:[#allocation7 + $0x12c] sm:$0xff]
    %v297 = vld [vmem:[#allocation7 + $0x134] sm:$0xf]
    %v298 = vld [vmem:[#allocation7 + $0x138] sm:$0xff]
    %v299 = vld [vmem:[#allocation7 + $0x140] sm:$0xf]
    %v300 = vld [vmem:[#allocation7 + $0x144] sm:$0xff]
    %v301 = vld [vmem:[#allocation7 + $0x14c] sm:$0xf]
    %v302 = vld [vmem:[#allocation7 + $0x150] sm:$0xff]
    %v303 = vld [vmem:[#allocation7 + $0x158] sm:$0xf]
    %v304 = vld [vmem:[#allocation7 + $0x15c] sm:$0xff]
    %v305 = vld [vmem:[#allocation7 + $0x164] sm:$0xf]
    %v306 = vld [vmem:[#allocation7 + $0x168] sm:$0xff]
    %v307 = vld [vmem:[#allocation7 + $0x170] sm:$0xf]
    %v308 = vld [vmem:[#allocation7 + $0x174] sm:$0xff]
    %v309 = vld [vmem:[#allocation7 + $0x17c] sm:$0xf]
    %v310 = vld [vmem:[#allocation7 + $0x180] sm:$0xff]
    %v311 = vld [vmem:[#allocation7 + $0x188] sm:$0xf]
    %v312 = vld [vmem:[#allocation7 + $0x18c] sm:$0xff]
    %v313 = vld [vmem:[#allocation7 + $0x194] sm:$0xf]
    %v314 = vld [vmem:[#allocation7 + $0x198] sm:$0xff]
    %v315 = vld [vmem:[#allocation7 + $0x1a0] sm:$0xf]
    %v316 = vld [vmem:[#allocation7 + $0x1a4] sm:$0xff]
    %v317 = vld [vmem:[#allocation7 + $0x1ac] sm:$0xf]
    %v318 = vld [vmem:[#allocation7 + $0x1b0] sm:$0xff]
    %v319 = vld [vmem:[#allocation7 + $0x1b8] sm:$0xf]
    %v320 = vld [vmem:[#allocation7 + $0x1bc] sm:$0xff]
    %v321 = vld [vmem:[#allocation7 + $0x1c4] sm:$0xf]
    %v322 = vld [vmem:[#allocation7 + $0x1c8] sm:$0xff]
    %v323 = vld [vmem:[#allocation7 + $0x1d0] sm:$0xf]
    %v324 = vld [vmem:[#allocation7 + $0x1d4] sm:$0xff]
    %v325 = vld [vmem:[#allocation7 + $0x1dc] sm:$0xf]
    %v326 = vld [vmem:[#allocation7 + $0x1e0] sm:$0xff]
    %v327 = vld [vmem:[#allocation7 + $0x1e8] sm:$0xf]
    %v328 = vld [vmem:[#allocation7 + $0x1ec] sm:$0xff]
    %v329 = vld [vmem:[#allocation7 + $0x1f4] sm:$0xf]
    %v330 = vld [vmem:[#allocation7 + $0x1f8] sm:$0xff]
    %v331 = vld [vmem:[#allocation7 + $0x200] sm:$0xf]
    %v332 = vld [vmem:[#allocation7 + $0x204] sm:$0xff]
    %v333 = vld [vmem:[#allocation7 + $0x20c] sm:$0xf]
    %v334 = vld [vmem:[#allocation7 + $0x210] sm:$0xff]
    %v335 = vld [vmem:[#allocation7 + $0x218] sm:$0xf]
    %v336 = vld [vmem:[#allocation7 + $0x21c] sm:$0xff]
    %v337 = vld [vmem:[#allocation7 + $0x224] sm:$0xf]
    %v338 = vld [vmem:[#allocation7 + $0x228] sm:$0xff]
    %v339 = vld [vmem:[#allocation7 + $0x230] sm:$0xf]
    %v340 = vld [vmem:[#allocation7 + $0x234] sm:$0xff]
    %v341 = vld [vmem:[#allocation7 + $0x23c] sm:$0xf]
    %v342 = vld [vmem:[#allocation7 + $0x240] sm:$0xff]
    %v343 = vld [vmem:[#allocation7 + $0x248] sm:$0xf]
    %v344 = vld [vmem:[#allocation7 + $0x24c] sm:$0xff]
    %v345 = vld [vmem:[#allocation7 + $0x254] sm:$0xf]
    %v346 = vld [vmem:[#allocation7 + $0x258] sm:$0xff]
    %v347 = vld [vmem:[#allocation7 + $0x260] sm:$0xf]
    %v348 = vld [vmem:[#allocation7 + $0x264] sm:$0xff]
    %v349 = vld [vmem:[#allocation7 + $0x26c] sm:$0xf]
    %v350 = vld [vmem:[#allocation7 + $0x270] sm:$0xff]
    %v351 = vld [vmem:[#allocation7 + $0x278] sm:$0xf]
    %v352 = vld [vmem:[#allocation7 + $0x27c] sm:$0xff]
    %v353 = vld [vmem:[#allocation7 + $0x284] sm:$0xf]
    %v354 = vld [vmem:[#allocation7 + $0x288] sm:$0xff]
    %v355 = vld [vmem:[#allocation7 + $0x290] sm:$0xf]
    %v356 = vld [vmem:[#allocation7 + $0x294] sm:$0xff]
    %v357 = vld [vmem:[#allocation7 + $0x29c] sm:$0xf]
    %v358 = vld [vmem:[#allocation7 + $0x2a0] sm:$0xff]
    %v359 = vld [vmem:[#allocation7 + $0x2a8] sm:$0xf]
    %v360 = vld [vmem:[#allocation7 + $0x2ac] sm:$0xff]
    %v361 = vld [vmem:[#allocation7 + $0x2b4] sm:$0xf]
    %v362 = vld [vmem:[#allocation7 + $0x2b8] sm:$0xff]
    %v363 = vld [vmem:[#allocation7 + $0x2c0] sm:$0xf]
    %v364 = vld [vmem:[#allocation7 + $0x2c4] sm:$0xff]
    %v365 = vld [vmem:[#allocation7 + $0x2cc] sm:$0xf]
    %v366 = vld [vmem:[#allocation7 + $0x2d0] sm:$0xff]
    %v367 = vld [vmem:[#allocation7 + $0x2d8] sm:$0xf]
    %v368 = vld [vmem:[#allocation7 + $0x2dc] sm:$0xff]
    %v369 = vld [vmem:[#allocation7 + $0x2e4] sm:$0xf]
    %v370 = vld [vmem:[#allocation7 + $0x2e8] sm:$0xff]
    %v371 = vld [vmem:[#allocation7 + $0x2f0] sm:$0xf]
    %v372 = vld [vmem:[#allocation7 + $0x2f4] sm:$0xff]
    %v373 = vld [vmem:[#allocation7 + $0x2fc] sm:$0xf]
    %v374 = vld [vmem:[%s4] sm:$0x7]
    %v376 = vlaneseq
    %v377 = vshrl.u32 %v376, 7
    %v378 = vsub.s32 0, %v377
    %v379 = vrot.slane %v374, %v378
    %v380 = vlaneseq
    %v381 = vshrl.u32 %v380, 7
    %v382 = vsub.s32 1, %v381
    %v383 = vrot.slane %v374, %v382
    %v384 = vlaneseq
    %v385 = vshrl.u32 %v384, 7
    %v386 = vsub.s32 2, %v385
    %v387 = vrot.slane %v374, %v386
    %v519 = vunpack.c.l.b16 %v246
    %v520 = vunpack.c.h.b16 %v246
    %v521 = vunpack.c.l.b16 %v247
    %v522 = vunpack.c.l.b16 %v248
    %v523 = vunpack.c.h.b16 %v248
    %v524 = vunpack.c.l.b16 %v249
    %v525 = vunpack.c.l.b16 %v250
    %v526 = vunpack.c.h.b16 %v250
    %v527 = vunpack.c.l.b16 %v251
    %v528 = vunpack.c.l.b16 %v252
    %v529 = vunpack.c.h.b16 %v252
    %v530 = vunpack.c.l.b16 %v253
    %v531 = vunpack.c.l.b16 %v254
    %v532 = vunpack.c.h.b16 %v254
    %v533 = vunpack.c.l.b16 %v255
    %v534 = vunpack.c.l.b16 %v256
    %v535 = vunpack.c.h.b16 %v256
    %v536 = vunpack.c.l.b16 %v257
    %v537 = vunpack.c.l.b16 %v258
    %v538 = vunpack.c.h.b16 %v258
    %v539 = vunpack.c.l.b16 %v259
    %v540 = vunpack.c.l.b16 %v260
    %v541 = vunpack.c.h.b16 %v260
    %v542 = vunpack.c.l.b16 %v261
    %v543 = vunpack.c.l.b16 %v262
    %v544 = vunpack.c.h.b16 %v262
    %v545 = vunpack.c.l.b16 %v263
    %v546 = vunpack.c.l.b16 %v264
    %v547 = vunpack.c.h.b16 %v264
    %v548 = vunpack.c.l.b16 %v265
    %v549 = vunpack.c.l.b16 %v266
    %v550 = vunpack.c.h.b16 %v266
    %v551 = vunpack.c.l.b16 %v267
    %v552 = vunpack.c.l.b16 %v268
    %v553 = vunpack.c.h.b16 %v268
    %v554 = vunpack.c.l.b16 %v269
    %v555 = vunpack.c.l.b16 %v270
    %v556 = vunpack.c.h.b16 %v270
    %v557 = vunpack.c.l.b16 %v271
    %v558 = vunpack.c.l.b16 %v272
    %v559 = vunpack.c.h.b16 %v272
    %v560 = vunpack.c.l.b16 %v273
    %v561 = vunpack.c.l.b16 %v274
    %v562 = vunpack.c.h.b16 %v274
    %v563 = vunpack.c.l.b16 %v275
    %v564 = vunpack.c.l.b16 %v276
    %v565 = vunpack.c.h.b16 %v276
    %v566 = vunpack.c.l.b16 %v277
    %v567 = vunpack.c.l.b16 %v278
    %v568 = vunpack.c.h.b16 %v278
    %v569 = vunpack.c.l.b16 %v279
    %v570 = vunpack.c.l.b16 %v280
    %v571 = vunpack.c.h.b16 %v280
    %v572 = vunpack.c.l.b16 %v281
    %v573 = vunpack.c.l.b16 %v282
    %v574 = vunpack.c.h.b16 %v282
    %v575 = vunpack.c.l.b16 %v283
    %v576 = vunpack.c.l.b16 %v284
    %v577 = vunpack.c.h.b16 %v284
    %v578 = vunpack.c.l.b16 %v285
    %v579 = vunpack.c.l.b16 %v286
    %v580 = vunpack.c.h.b16 %v286
    %v581 = vunpack.c.l.b16 %v287
    %v582 = vunpack.c.l.b16 %v288
    %v583 = vunpack.c.h.b16 %v288
    %v584 = vunpack.c.l.b16 %v289
    %v585 = vunpack.c.l.b16 %v290
    %v586 = vunpack.c.h.b16 %v290
    %v587 = vunpack.c.l.b16 %v291
    %v588 = vunpack.c.l.b16 %v292
    %v589 = vunpack.c.h.b16 %v292
    %v590 = vunpack.c.l.b16 %v293
    %v591 = vunpack.c.l.b16 %v294
    %v592 = vunpack.c.h.b16 %v294
    %v593 = vunpack.c.l.b16 %v295
    %v594 = vunpack.c.l.b16 %v296
    %v595 = vunpack.c.h.b16 %v296
    %v596 = vunpack.c.l.b16 %v297
    %v597 = vunpack.c.l.b16 %v298
    %v598 = vunpack.c.h.b16 %v298
    %v599 = vunpack.c.l.b16 %v299
    %v600 = vunpack.c.l.b16 %v300
    %v601 = vunpack.c.h.b16 %v300
    %v602 = vunpack.c.l.b16 %v301
    %v603 = vunpack.c.l.b16 %v302
    %v604 = vunpack.c.h.b16 %v302
    %v605 = vunpack.c.l.b16 %v303
    %v606 = vunpack.c.l.b16 %v304
    %v607 = vunpack.c.h.b16 %v304
    %v608 = vunpack.c.l.b16 %v305
    %v609 = vunpack.c.l.b16 %v306
    %v610 = vunpack.c.h.b16 %v306
    %v611 = vunpack.c.l.b16 %v307
    %v612 = vunpack.c.l.b16 %v308
    %v613 = vunpack.c.h.b16 %v308
    %v614 = vunpack.c.l.b16 %v309
    %v615 = vunpack.c.l.b16 %v310
    %v616 = vunpack.c.h.b16 %v310
    %v617 = vunpack.c.l.b16 %v311
    %v618 = vunpack.c.l.b16 %v312
    %v619 = vunpack.c.h.b16 %v312
    %v620 = vunpack.c.l.b16 %v313
    %v621 = vunpack.c.l.b16 %v314
    %v622 = vunpack.c.h.b16 %v314
    %v623 = vunpack.c.l.b16 %v315
    %v624 = vunpack.c.l.b16 %v316
    %v625 = vunpack.c.h.b16 %v316
    %v626 = vunpack.c.l.b16 %v317
    %v627 = vunpack.c.l.b16 %v318
    %v628 = vunpack.c.h.b16 %v318
    %v629 = vunpack.c.l.b16 %v319
    %v630 = vunpack.c.l.b16 %v320
    %v631 = vunpack.c.h.b16 %v320
    %v632 = vunpack.c.l.b16 %v321
    %v633 = vunpack.c.l.b16 %v322
    %v634 = vunpack.c.h.b16 %v322
    %v635 = vunpack.c.l.b16 %v323
    %v636 = vunpack.c.l.b16 %v324
    %v637 = vunpack.c.h.b16 %v324
    %v638 = vunpack.c.l.b16 %v325
    %v639 = vunpack.c.l.b16 %v326
    %v640 = vunpack.c.h.b16 %v326
    %v641 = vunpack.c.l.b16 %v327
    %v642 = vunpack.c.l.b16 %v328
    %v643 = vunpack.c.h.b16 %v328
    %v644 = vunpack.c.l.b16 %v329
    %v645 = vunpack.c.l.b16 %v330
    %v646 = vunpack.c.h.b16 %v330
    %v647 = vunpack.c.l.b16 %v331
    %v648 = vunpack.c.l.b16 %v332
    %v649 = vunpack.c.h.b16 %v332
    %v650 = vunpack.c.l.b16 %v333
    %v651 = vunpack.c.l.b16 %v334
    %v652 = vunpack.c.h.b16 %v334
    %v653 = vunpack.c.l.b16 %v335
    %v654 = vunpack.c.l.b16 %v336
    %v655 = vunpack.c.h.b16 %v336
    %v656 = vunpack.c.l.b16 %v337
    %v657 = vunpack.c.l.b16 %v338
    %v658 = vunpack.c.h.b16 %v338
    %v659 = vunpack.c.l.b16 %v339
    %v660 = vunpack.c.l.b16 %v340
    %v661 = vunpack.c.h.b16 %v340
    %v662 = vunpack.c.l.b16 %v341
    %v663 = vunpack.c.l.b16 %v342
    %v664 = vunpack.c.h.b16 %v342
    %v665 = vunpack.c.l.b16 %v343
    %v666 = vunpack.c.l.b16 %v344
    %v667 = vunpack.c.h.b16 %v344
    %v668 = vunpack.c.l.b16 %v345
    %v669 = vunpack.c.l.b16 %v346
    %v670 = vunpack.c.h.b16 %v346
    %v671 = vunpack.c.l.b16 %v347
    %v672 = vunpack.c.l.b16 %v348
    %v673 = vunpack.c.h.b16 %v348
    %v674 = vunpack.c.l.b16 %v349
    %v675 = vunpack.c.l.b16 %v350
    %v676 = vunpack.c.h.b16 %v350
    %v677 = vunpack.c.l.b16 %v351
    %v678 = vunpack.c.l.b16 %v352
    %v679 = vunpack.c.h.b16 %v352
    %v680 = vunpack.c.l.b16 %v353
    %v681 = vunpack.c.l.b16 %v354
    %v682 = vunpack.c.h.b16 %v354
    %v683 = vunpack.c.l.b16 %v355
    %v684 = vunpack.c.l.b16 %v356
    %v685 = vunpack.c.h.b16 %v356
    %v686 = vunpack.c.l.b16 %v357
    %v687 = vunpack.c.l.b16 %v358
    %v688 = vunpack.c.h.b16 %v358
    %v689 = vunpack.c.l.b16 %v359
    %v690 = vunpack.c.l.b16 %v360
    %v691 = vunpack.c.h.b16 %v360
    %v692 = vunpack.c.l.b16 %v361
    %v693 = vunpack.c.l.b16 %v362
    %v694 = vunpack.c.h.b16 %v362
    %v695 = vunpack.c.l.b16 %v363
    %v696 = vunpack.c.l.b16 %v364
    %v697 = vunpack.c.h.b16 %v364
    %v698 = vunpack.c.l.b16 %v365
    %v699 = vunpack.c.l.b16 %v366
    %v700 = vunpack.c.h.b16 %v366
    %v701 = vunpack.c.l.b16 %v367
    %v702 = vunpack.c.l.b16 %v368
    %v703 = vunpack.c.h.b16 %v368
    %v704 = vunpack.c.l.b16 %v369
    %v705 = vunpack.c.l.b16 %v370
    %v706 = vunpack.c.h.b16 %v370
    %v707 = vunpack.c.l.b16 %v371
    %v708 = vunpack.c.l.b16 %v372
    %v709 = vunpack.c.h.b16 %v372
    %v710 = vunpack.c.l.b16 %v373
    %v711 = vpack.c.b16 %v522, %v519
    %v712 = vpack.c.b16 %v523, %v520
    %v713 = vpack.c.b16 %v524, %v521
    %v714 = vpack.c.b16 %v528, %v525
    %v715 = vpack.c.b16 %v529, %v526
    %v716 = vpack.c.b16 %v530, %v527
    %v717 = vpack.c.b16 %v534, %v531
    %v718 = vpack.c.b16 %v535, %v532
    %v719 = vpack.c.b16 %v536, %v533
    %v720 = vpack.c.b16 %v540, %v537
    %v721 = vpack.c.b16 %v541, %v538
    %v722 = vpack.c.b16 %v542, %v539
    %v723 = vpack.c.b16 %v546, %v543
    %v724 = vpack.c.b16 %v547, %v544
    %v725 = vpack.c.b16 %v548, %v545
    %v726 = vpack.c.b16 %v552, %v549
    %v727 = vpack.c.b16 %v553, %v550
    %v728 = vpack.c.b16 %v554, %v551
    %v729 = vpack.c.b16 %v558, %v555
    %v730 = vpack.c.b16 %v559, %v556
    %v731 = vpack.c.b16 %v560, %v557
    %v732 = vpack.c.b16 %v564, %v561
    %v733 = vpack.c.b16 %v565, %v562
    %v734 = vpack.c.b16 %v566, %v563
    %v735 = vpack.c.b16 %v570, %v567
    %v736 = vpack.c.b16 %v571, %v568
    %v737 = vpack.c.b16 %v572, %v569
    %v738 = vpack.c.b16 %v576, %v573
    %v739 = vpack.c.b16 %v577, %v574
    %v740 = vpack.c.b16 %v578, %v575
    %v741 = vpack.c.b16 %v582, %v579
    %v742 = vpack.c.b16 %v583, %v580
    %v743 = vpack.c.b16 %v584, %v581
    %v744 = vpack.c.b16 %v588, %v585
    %v745 = vpack.c.b16 %v589, %v586
    %v746 = vpack.c.b16 %v590, %v587
    %v747 = vpack.c.b16 %v594, %v591
    %v748 = vpack.c.b16 %v595, %v592
    %v749 = vpack.c.b16 %v596, %v593
    %v750 = vpack.c.b16 %v600, %v597
    %v751 = vpack.c.b16 %v601, %v598
    %v752 = vpack.c.b16 %v602, %v599
    %v753 = vpack.c.b16 %v606, %v603
    %v754 = vpack.c.b16 %v607, %v604
    %v755 = vpack.c.b16 %v608, %v605
    %v756 = vpack.c.b16 %v612, %v609
    %v757 = vpack.c.b16 %v613, %v610
    %v758 = vpack.c.b16 %v614, %v611
    %v759 = vpack.c.b16 %v618, %v615
    %v760 = vpack.c.b16 %v619, %v616
    %v761 = vpack.c.b16 %v620, %v617
    %v762 = vpack.c.b16 %v624, %v621
    %v763 = vpack.c.b16 %v625, %v622
    %v764 = vpack.c.b16 %v626, %v623
    %v765 = vpack.c.b16 %v630, %v627
    %v766 = vpack.c.b16 %v631, %v628
    %v767 = vpack.c.b16 %v632, %v629
    %v768 = vpack.c.b16 %v636, %v633
    %v769 = vpack.c.b16 %v637, %v634
    %v770 = vpack.c.b16 %v638, %v635
    %v771 = vpack.c.b16 %v642, %v639
    %v772 = vpack.c.b16 %v643, %v640
    %v773 = vpack.c.b16 %v644, %v641
    %v774 = vpack.c.b16 %v648, %v645
    %v775 = vpack.c.b16 %v649, %v646
    %v776 = vpack.c.b16 %v650, %v647
    %v777 = vpack.c.b16 %v654, %v651
    %v778 = vpack.c.b16 %v655, %v652
    %v779 = vpack.c.b16 %v656, %v653
    %v780 = vpack.c.b16 %v660, %v657
    %v781 = vpack.c.b16 %v661, %v658
    %v782 = vpack.c.b16 %v662, %v659
    %v783 = vpack.c.b16 %v666, %v663
    %v784 = vpack.c.b16 %v667, %v664
    %v785 = vpack.c.b16 %v668, %v665
    %v786 = vpack.c.b16 %v672, %v669
    %v787 = vpack.c.b16 %v673, %v670
    %v788 = vpack.c.b16 %v674, %v671
    %v789 = vpack.c.b16 %v678, %v675
    %v790 = vpack.c.b16 %v679, %v676
    %v791 = vpack.c.b16 %v680, %v677
    %v792 = vpack.c.b16 %v684, %v681
    %v793 = vpack.c.b16 %v685, %v682
    %v794 = vpack.c.b16 %v686, %v683
    %v795 = vpack.c.b16 %v690, %v687
    %v796 = vpack.c.b16 %v691, %v688
    %v797 = vpack.c.b16 %v692, %v689
    %v798 = vpack.c.b16 %v696, %v693
    %v799 = vpack.c.b16 %v697, %v694
    %v800 = vpack.c.b16 %v698, %v695
    %v801 = vpack.c.b16 %v702, %v699
    %v802 = vpack.c.b16 %v703, %v700
    %v803 = vpack.c.b16 %v704, %v701
    %v804 = vpack.c.b16 %v708, %v705
    %v805 = vpack.c.b16 %v709, %v706
    %v806 = vpack.c.b16 %v710, %v707
    %903 = vmatprep.subr.bf16.mxu0 %v712
    %904 = vmatpush1.bf16.msra.mxu0 %v711
    %905 = vmatprep.subr.bf16.mxu0 %v715
    %906 = vmatpush1.bf16.msra.mxu0 %v714
    %907 = vmatprep.subr.bf16.mxu0 %v718
    %908 = vmatpush1.bf16.msra.mxu0 %v717
    %909 = vmatprep.subr.bf16.mxu0 %v721
    %910 = vmatpush1.bf16.msra.mxu0 %v720
    %911 = vmatprep.subr.bf16.mxu0 %v724
    %912 = vmatpush1.bf16.msra.mxu0 %v723
    %913 = vmatprep.subr.bf16.mxu0 %v727
    %914 = vmatpush1.bf16.msra.mxu0 %v726
    %915 = vmatprep.subr.bf16.mxu0 %v730
    %916 = vmatpush1.bf16.msra.mxu0 %v729
    %917 = vmatprep.subr.bf16.mxu0 %v733
    %918 = vmatpush1.bf16.msra.mxu0 %v732
    %919 = vmatprep.subr.bf16.mxu0 %v736
    %920 = vmatpush1.bf16.msra.mxu0 %v735
    %921 = vmatprep.subr.bf16.mxu0 %v739
    %922 = vmatpush1.bf16.msra.mxu0 %v738
    %923 = vmatprep.subr.bf16.mxu0 %v742
    %924 = vmatpush1.bf16.msra.mxu0 %v741
    %925 = vmatprep.subr.bf16.mxu0 %v745
    %926 = vmatpush1.bf16.msra.mxu0 %v744
    %927 = vmatprep.subr.bf16.mxu0 %v748
    %928 = vmatpush1.bf16.msra.mxu0 %v747
    %929 = vmatprep.subr.bf16.mxu0 %v751
    %930 = vmatpush1.bf16.msra.mxu0 %v750
    %931 = vmatprep.subr.bf16.mxu0 %v754
    %932 = vmatpush1.bf16.msra.mxu0 %v753
    %933 = vmatprep.subr.bf16.mxu0 %v757
    %934 = vmatpush1.bf16.msra.mxu0 %v756
    %935 = vmatprep.mubr.bf16.mxu0 %v243
    %936 = vmatmul.mubr.bf16.gmra.mrb[0].mxu0 %v242
    %v937 = vpop.f32.mrb[0].mxu0
    %v938 = vadd.f32 %v379, %v937
    %v939 = vpop.f32.mrb[0].mxu0
    %v940 = vadd.f32 %v383, %v939
    %v941 = vpop.f32.mrb[0].mxu0
    %v942 = vpop.f32.mrb[0].mxu0
    %943 = vdwg.mxu0
    %944 = vmatprep.subr.bf16.mxu0 %v760
    %945 = vmatpush1.bf16.msra.mxu0 %v759
    %946 = vmatprep.subr.bf16.mxu0 %v763
    %947 = vmatpush1.bf16.msra.mxu0 %v762
    %948 = vmatprep.subr.bf16.mxu0 %v766
    %949 = vmatpush1.bf16.msra.mxu0 %v765
    %950 = vmatprep.subr.bf16.mxu0 %v769
    %951 = vmatpush1.bf16.msra.mxu0 %v768
    %952 = vmatprep.subr.bf16.mxu0 %v772
    %953 = vmatpush1.bf16.msra.mxu0 %v771
    %954 = vmatprep.subr.bf16.mxu0 %v775
    %955 = vmatpush1.bf16.msra.mxu0 %v774
    %956 = vmatprep.subr.bf16.mxu0 %v778
    %957 = vmatpush1.bf16.msra.mxu0 %v777
    %958 = vmatprep.subr.bf16.mxu0 %v781
    %959 = vmatpush1.bf16.msra.mxu0 %v780
    %960 = vmatprep.subr.bf16.mxu0 %v784
    %961 = vmatpush1.bf16.msra.mxu0 %v783
    %962 = vmatprep.subr.bf16.mxu0 %v787
    %963 = vmatpush1.bf16.msra.mxu0 %v786
    %964 = vmatprep.subr.bf16.mxu0 %v790
    %965 = vmatpush1.bf16.msra.mxu0 %v789
    %966 = vmatprep.subr.bf16.mxu0 %v793
    %967 = vmatpush1.bf16.msra.mxu0 %v792
    %968 = vmatprep.subr.bf16.mxu0 %v796
    %969 = vmatpush1.bf16.msra.mxu0 %v795
    %970 = vmatprep.subr.bf16.mxu0 %v799
    %971 = vmatpush1.bf16.msra.mxu0 %v798
    %972 = vmatprep.subr.bf16.mxu0 %v802
    %973 = vmatpush1.bf16.msra.mxu0 %v801
    %974 = vmatprep.subr.bf16.mxu0 %v805
    %975 = vmatpush1.bf16.msra.mxu0 %v804
    %976 = vmatprep.mubr.bf16.mxu0 %v245
    %977 = vmatmul.mubr.bf16.gmra.mrb[0].mxu0 %v244
    %v978 = vpop.f32.mrb[0].mxu0
    %v979 = vadd.f32 %v938, %v978
    %v980 = vpop.f32.mrb[0].mxu0
    %v981 = vadd.f32 %v940, %v980
    %v982 = vpop.f32.mrb[0].mxu0
    %v983 = vpop.f32.mrb[0].mxu0
    %984 = vdwg.mxu0
    %985 = vmatprep.subr.bf16.mxu0 0
    %986 = vmatpush1.bf16.msra.mxu0 %v713
    %987 = vmatprep.subr.bf16.mxu0 0
    %988 = vmatpush1.bf16.msra.mxu0 %v716
    %989 = vmatprep.subr.bf16.mxu0 0
    %990 = vmatpush1.bf16.msra.mxu0 %v719
    %991 = vmatprep.subr.bf16.mxu0 0
    %992 = vmatpush1.bf16.msra.mxu0 %v722
    %993 = vmatprep.subr.bf16.mxu0 0
    %994 = vmatpush1.bf16.msra.mxu0 %v725
    %995 = vmatprep.subr.bf16.mxu0 0
    %996 = vmatpush1.bf16.msra.mxu0 %v728
    %997 = vmatprep.subr.bf16.mxu0 0
    %998 = vmatpush1.bf16.msra.mxu0 %v731
    %999 = vmatprep.subr.bf16.mxu0 0
    %1000 = vmatpush1.bf16.msra.mxu0 %v734
    %1001 = vmatprep.subr.bf16.mxu0 0
    %1002 = vmatpush1.bf16.msra.mxu0 %v737
    %1003 = vmatprep.subr.bf16.mxu0 0
    %1004 = vmatpush1.bf16.msra.mxu0 %v740
    %1005 = vmatprep.subr.bf16.mxu0 0
    %1006 = vmatpush1.bf16.msra.mxu0 %v743
    %1007 = vmatprep.subr.bf16.mxu0 0
    %1008 = vmatpush1.bf16.msra.mxu0 %v746
    %1009 = vmatprep.subr.bf16.mxu0 0
    %1010 = vmatpush1.bf16.msra.mxu0 %v749
    %1011 = vmatprep.subr.bf16.mxu0 0
    %1012 = vmatpush1.bf16.msra.mxu0 %v752
    %1013 = vmatprep.subr.bf16.mxu0 0
    %1014 = vmatpush1.bf16.msra.mxu0 %v755
    %1015 = vmatprep.subr.bf16.mxu0 0
    %1016 = vmatpush1.bf16.msra.mxu0 %v758
    %1017 = vmatprep.mubr.bf16.mxu0 %v243
    %1018 = vmatmul.mubr.bf16.gmra.mrb[0].mxu0 %v242
    %v1019 = vpop.f32.mrb[0].mxu0
    %v1020 = vadd.f32 %v387, %v1019
    %v1021 = vpop.f32.mrb[0].mxu0
    %v1022 = vpop.f32.mrb[0].mxu0
    %v1023 = vpop.f32.mrb[0].mxu0
    %1024 = vdwg.mxu0
    %1025 = vmatprep.subr.bf16.mxu0 0
    %1026 = vmatpush1.bf16.msra.mxu0 %v761
    %1027 = vmatprep.subr.bf16.mxu0 0
    %1028 = vmatpush1.bf16.msra.mxu0 %v764
    %1029 = vmatprep.subr.bf16.mxu0 0
    %1030 = vmatpush1.bf16.msra.mxu0 %v767
    %1031 = vmatprep.subr.bf16.mxu0 0
    %1032 = vmatpush1.bf16.msra.mxu0 %v770
    %1033 = vmatprep.subr.bf16.mxu0 0
    %1034 = vmatpush1.bf16.msra.mxu0 %v773
    %1035 = vmatprep.subr.bf16.mxu0 0
    %1036 = vmatpush1.bf16.msra.mxu0 %v776
    %1037 = vmatprep.subr.bf16.mxu0 0
    %1038 = vmatpush1.bf16.msra.mxu0 %v779
    %1039 = vmatprep.subr.bf16.mxu0 0
    %1040 = vmatpush1.bf16.msra.mxu0 %v782
    %1041 = vmatprep.subr.bf16.mxu0 0
    %1042 = vmatpush1.bf16.msra.mxu0 %v785
    %1043 = vmatprep.subr.bf16.mxu0 0
    %1044 = vmatpush1.bf16.msra.mxu0 %v788
    %1045 = vmatprep.subr.bf16.mxu0 0
    %1046 = vmatpush1.bf16.msra.mxu0 %v791
    %1047 = vmatprep.subr.bf16.mxu0 0
    %1048 = vmatpush1.bf16.msra.mxu0 %v794
    %1049 = vmatprep.subr.bf16.mxu0 0
    %1050 = vmatpush1.bf16.msra.mxu0 %v797
    %1051 = vmatprep.subr.bf16.mxu0 0
    %1052 = vmatpush1.bf16.msra.mxu0 %v800
    %1053 = vmatprep.subr.bf16.mxu0 0
    %1054 = vmatpush1.bf16.msra.mxu0 %v803
    %1055 = vmatprep.subr.bf16.mxu0 0
    %1056 = vmatpush1.bf16.msra.mxu0 %v806
    %1057 = vmatprep.mubr.bf16.mxu0 %v245
    %1058 = vmatmul.mubr.bf16.gmra.mrb[0].mxu0 %v244
    %v1059 = vpop.f32.mrb[0].mxu0
    %v1060 = vadd.f32 %v1020, %v1059
    %v1061 = vpop.f32.mrb[0].mxu0
    %v1062 = vpop.f32.mrb[0].mxu0
    %v1063 = vpop.f32.mrb[0].mxu0
    %1064 = vdwg.mxu0
    %v1065 = vmax.f32 %v979, 0.0
    %v1066 = vmax.f32 %v981, 0.0
    %v1067 = vmax.f32 %v1060, 0.0
    %v1068 = vpack.c.bf16 %v1065, %v1065
    %v1069 = vpack.c.bf16 %v1066, %v1066
    %v1070 = vpack.c.bf16 %v1067, %v1067
    %v1071 = vld [vmem:[#allocation8] sm:$0xf]
    %v1072 = vld [vmem:[#allocation8 + $0x4] sm:$0xf]
    %v1073 = vld [vmem:[#allocation8 + $0x8] sm:$0xf]
    %v1074 = vld [vmem:[#allocation8 + $0xc] sm:$0xf]
    %v1075 = vld [vmem:[#allocation8 + $0x10] sm:$0xf]
    %v1076 = vld [vmem:[#allocation8 + $0x14] sm:$0xf]
    %v1077 = vld [vmem:[#allocation8 + $0x18] sm:$0xf]
    %v1078 = vld [vmem:[#allocation8 + $0x1c] sm:$0xf]
    %v1079 = vld [vmem:[#allocation8 + $0x20] sm:$0xf]
    %v1080 = vld [vmem:[#allocation8 + $0x24] sm:$0xf]
    %v1081 = vld [vmem:[#allocation8 + $0x28] sm:$0xf]
    %v1082 = vld [vmem:[#allocation8 + $0x2c] sm:$0xf]
    %v1083 = vld [vmem:[#allocation8 + $0x30] sm:$0xf]
    %v1084 = vld [vmem:[#allocation8 + $0x34] sm:$0xf]
    %v1085 = vld [vmem:[#allocation8 + $0x38] sm:$0xf]
    %v1086 = vld [vmem:[#allocation8 + $0x3c] sm:$0xf]
    %v1087 = vld [vmem:[#allocation8 + $0x40] sm:$0xf]
    %v1088 = vld [vmem:[#allocation8 + $0x44] sm:$0xf]
    %v1089 = vld [vmem:[#allocation8 + $0x48] sm:$0xf]
    %v1090 = vld [vmem:[#allocation8 + $0x4c] sm:$0xf]
    %v1091 = vld [vmem:[#allocation8 + $0x50] sm:$0xf]
    %v1092 = vld [vmem:[#allocation8 + $0x54] sm:$0xf]
    %v1093 = vld [vmem:[#allocation8 + $0x58] sm:$0xf]
    %v1094 = vld [vmem:[#allocation8 + $0x5c] sm:$0xf]
    %v1095 = vld [vmem:[#allocation8 + $0x60] sm:$0xf]
    %v1096 = vld [vmem:[#allocation8 + $0x64] sm:$0xf]
    %v1097 = vld [vmem:[#allocation8 + $0x68] sm:$0xf]
    %v1098 = vld [vmem:[#allocation8 + $0x6c] sm:$0xf]
    %v1099 = vld [vmem:[#allocation8 + $0x70] sm:$0xf]
    %v1100 = vld [vmem:[#allocation8 + $0x74] sm:$0xf]
    %v1101 = vld [vmem:[#allocation8 + $0x78] sm:$0xf]
    %v1102 = vld [vmem:[#allocation8 + $0x7c] sm:$0xf]
    %v1103 = vld [vmem:[#allocation8 + $0x80] sm:$0xf]
    %v1104 = vld [vmem:[#allocation8 + $0x84] sm:$0xf]
    %v1105 = vld [vmem:[#allocation8 + $0x88] sm:$0xf]
    %v1106 = vld [vmem:[#allocation8 + $0x8c] sm:$0xf]
    %v1107 = vld [vmem:[#allocation8 + $0x90] sm:$0xf]
    %v1108 = vld [vmem:[#allocation8 + $0x94] sm:$0xf]
    %v1109 = vld [vmem:[#allocation8 + $0x98] sm:$0xf]
    %v1110 = vld [vmem:[#allocation8 + $0x9c] sm:$0xf]
    %v1111 = vld [vmem:[#allocation8 + $0xa0] sm:$0xf]
    %v1112 = vld [vmem:[#allocation8 + $0xa4] sm:$0xf]
    %v1113 = vld [vmem:[#allocation8 + $0xa8] sm:$0xf]
    %v1114 = vld [vmem:[#allocation8 + $0xac] sm:$0xf]
    %v1115 = vld [vmem:[#allocation8 + $0xb0] sm:$0xf]
    %v1116 = vld [vmem:[#allocation8 + $0xb4] sm:$0xf]
    %v1117 = vld [vmem:[#allocation8 + $0xb8] sm:$0xf]
    %v1118 = vld [vmem:[#allocation8 + $0xbc] sm:$0xf]
    %v1119 = vld [vmem:[%s6] sm:$0x1]
    %v1121 = vlaneseq
    %v1122 = vshrl.u32 %v1121, 7
    %v1123 = vsub.s32 0, %v1122
    %v1124 = vrot.slane %v1119, %v1123
    %v1174 = vunpack.c.l.b16 %v1071
    %v1175 = vunpack.c.l.b16 %v1072
    %v1176 = vunpack.c.l.b16 %v1073
    %v1177 = vunpack.c.l.b16 %v1074
    %v1178 = vunpack.c.l.b16 %v1075
    %v1179 = vunpack.c.l.b16 %v1076
    %v1180 = vunpack.c.l.b16 %v1077
    %v1181 = vunpack.c.l.b16 %v1078
    %v1182 = vunpack.c.l.b16 %v1079
    %v1183 = vunpack.c.l.b16 %v1080
    %v1184 = vunpack.c.l.b16 %v1081
    %v1185 = vunpack.c.l.b16 %v1082
    %v1186 = vunpack.c.l.b16 %v1083
    %v1187 = vunpack.c.l.b16 %v1084
    %v1188 = vunpack.c.l.b16 %v1085
    %v1189 = vunpack.c.l.b16 %v1086
    %v1190 = vunpack.c.l.b16 %v1087
    %v1191 = vunpack.c.l.b16 %v1088
    %v1192 = vunpack.c.l.b16 %v1089
    %v1193 = vunpack.c.l.b16 %v1090
    %v1194 = vunpack.c.l.b16 %v1091
    %v1195 = vunpack.c.l.b16 %v1092
    %v1196 = vunpack.c.l.b16 %v1093
    %v1197 = vunpack.c.l.b16 %v1094
    %v1198 = vunpack.c.l.b16 %v1095
    %v1199 = vunpack.c.l.b16 %v1096
    %v1200 = vunpack.c.l.b16 %v1097
    %v1201 = vunpack.c.l.b16 %v1098
    %v1202 = vunpack.c.l.b16 %v1099
    %v1203 = vunpack.c.l.b16 %v1100
    %v1204 = vunpack.c.l.b16 %v1101
    %v1205 = vunpack.c.l.b16 %v1102
    %v1206 = vunpack.c.l.b16 %v1103
    %v1207 = vunpack.c.l.b16 %v1104
    %v1208 = vunpack.c.l.b16 %v1105
    %v1209 = vunpack.c.l.b16 %v1106
    %v1210 = vunpack.c.l.b16 %v1107
    %v1211 = vunpack.c.l.b16 %v1108
    %v1212 = vunpack.c.l.b16 %v1109
    %v1213 = vunpack.c.l.b16 %v1110
    %v1214 = vunpack.c.l.b16 %v1111
    %v1215 = vunpack.c.l.b16 %v1112
    %v1216 = vunpack.c.l.b16 %v1113
    %v1217 = vunpack.c.l.b16 %v1114
    %v1218 = vunpack.c.l.b16 %v1115
    %v1219 = vunpack.c.l.b16 %v1116
    %v1220 = vunpack.c.l.b16 %v1117
    %v1221 = vunpack.c.l.b16 %v1118
    %v1222 = vpack.c.b16 %v1175, %v1174
    %v1223 = vpack.c.b16 %v1177, %v1176
    %v1224 = vpack.c.b16 %v1179, %v1178
    %v1225 = vpack.c.b16 %v1181, %v1180
    %v1226 = vpack.c.b16 %v1183, %v1182
    %v1227 = vpack.c.b16 %v1185, %v1184
    %v1228 = vpack.c.b16 %v1187, %v1186
    %v1229 = vpack.c.b16 %v1189, %v1188
    %v1230 = vpack.c.b16 %v1191, %v1190
    %v1231 = vpack.c.b16 %v1193, %v1192
    %v1232 = vpack.c.b16 %v1195, %v1194
    %v1233 = vpack.c.b16 %v1197, %v1196
    %v1234 = vpack.c.b16 %v1199, %v1198
    %v1235 = vpack.c.b16 %v1201, %v1200
    %v1236 = vpack.c.b16 %v1203, %v1202
    %v1237 = vpack.c.b16 %v1205, %v1204
    %v1238 = vpack.c.b16 %v1207, %v1206
    %v1239 = vpack.c.b16 %v1209, %v1208
    %v1240 = vpack.c.b16 %v1211, %v1210
    %v1241 = vpack.c.b16 %v1213, %v1212
    %v1242 = vpack.c.b16 %v1215, %v1214
    %v1243 = vpack.c.b16 %v1217, %v1216
    %v1244 = vpack.c.b16 %v1219, %v1218
    %v1245 = vpack.c.b16 %v1221, %v1220
    %1270 = vmatprep.subr.bf16.mxu0 0
    %1271 = vmatpush1.bf16.msra.mxu0 %v1222
    %1272 = vmatprep.subr.bf16.mxu0 0
    %1273 = vmatpush1.bf16.msra.mxu0 %v1223
    %1274 = vmatprep.subr.bf16.mxu0 0
    %1275 = vmatpush1.bf16.msra.mxu0 %v1224
    %1276 = vmatprep.subr.bf16.mxu0 0
    %1277 = vmatpush1.bf16.msra.mxu0 %v1225
    %1278 = vmatprep.subr.bf16.mxu0 0
    %1279 = vmatpush1.bf16.msra.mxu0 %v1226
    %1280 = vmatprep.subr.bf16.mxu0 0
    %1281 = vmatpush1.bf16.msra.mxu0 %v1227
    %1282 = vmatprep.subr.bf16.mxu0 0
    %1283 = vmatpush1.bf16.msra.mxu0 %v1228
    %1284 = vmatprep.subr.bf16.mxu0 0
    %1285 = vmatpush1.bf16.msra.mxu0 %v1229
    %1286 = vmatprep.subr.bf16.mxu0 0
    %1287 = vmatpush1.bf16.msra.mxu0 %v1230
    %1288 = vmatprep.subr.bf16.mxu0 0
    %1289 = vmatpush1.bf16.msra.mxu0 %v1231
    %1290 = vmatprep.subr.bf16.mxu0 0
    %1291 = vmatpush1.bf16.msra.mxu0 %v1232
    %1292 = vmatprep.subr.bf16.mxu0 0
    %1293 = vmatpush1.bf16.msra.mxu0 %v1233
    %1294 = vmatprep.subr.bf16.mxu0 0
    %1295 = vmatpush1.bf16.msra.mxu0 %v1234
    %1296 = vmatprep.subr.bf16.mxu0 0
    %1297 = vmatpush1.bf16.msra.mxu0 %v1235
    %1298 = vmatprep.subr.bf16.mxu0 0
    %1299 = vmatpush1.bf16.msra.mxu0 %v1236
    %1300 = vmatprep.subr.bf16.mxu0 0
    %1301 = vmatpush1.bf16.msra.mxu0 %v1237
    %1302 = vmatprep.mubr.bf16.mxu0 %v1069
    %1303 = vmatmul.mubr.bf16.gmra.mrb[0].mxu0 %v1068
    %v1304 = vpop.f32.mrb[0].mxu0
    %v1305 = vadd.f32 %v1124, %v1304
    %v1306 = vpop.f32.mrb[0].mxu0
    %v1307 = vpop.f32.mrb[0].mxu0
    %v1308 = vpop.f32.mrb[0].mxu0
    %1309 = vdwg.mxu0
    %1310 = vmatprep.subr.bf16.mxu0 0
    %1311 = vmatpush1.bf16.msra.mxu0 %v1238
    %1312 = vmatprep.subr.bf16.mxu0 0
    %1313 = vmatpush1.bf16.msra.mxu0 %v1239
    %1314 = vmatprep.subr.bf16.mxu0 0
    %1315 = vmatpush1.bf16.msra.mxu0 %v1240
    %1316 = vmatprep.subr.bf16.mxu0 0
    %1317 = vmatpush1.bf16.msra.mxu0 %v1241
    %1318 = vmatprep.subr.bf16.mxu0 0
    %1319 = vmatpush1.bf16.msra.mxu0 %v1242
    %1320 = vmatprep.subr.bf16.mxu0 0
    %1321 = vmatpush1.bf16.msra.mxu0 %v1243
    %1322 = vmatprep.subr.bf16.mxu0 0
    %1323 = vmatpush1.bf16.msra.mxu0 %v1244
    %1324 = vmatprep.subr.bf16.mxu0 0
    %1325 = vmatpush1.bf16.msra.mxu0 %v1245
    %1326 = vmatprep.subr.bf16.mxu0 0
    %1327 = vmatpush1.bf16.msra.mxu0 0
    %1328 = vmatprep.subr.bf16.mxu0 0
    %1329 = vmatpush1.bf16.msra.mxu0 0
    %1330 = vmatprep.subr.bf16.mxu0 0
    %1331 = vmatpush1.bf16.msra.mxu0 0
    %1332 = vmatprep.subr.bf16.mxu0 0
    %1333 = vmatpush1.bf16.msra.mxu0 0
    %1334 = vmatprep.subr.bf16.mxu0 0
    %1335 = vmatpush1.bf16.msra.mxu0 0
    %1336 = vmatprep.subr.bf16.mxu0 0
    %1337 = vmatpush1.bf16.msra.mxu0 0
    %1338 = vmatprep.subr.bf16.mxu0 0
    %1339 = vmatpush1.bf16.msra.mxu0 0
    %1340 = vmatprep.subr.bf16.mxu0 0
    %1341 = vmatpush1.bf16.msra.mxu0 0
    %1342 = vmatprep.mubr.bf16.mxu0 0
    %1343 = vmatmul.mubr.bf16.gmra.mrb[0].mxu0 %v1070
    %v1344 = vpop.f32.mrb[0].mxu0
    %v1345 = vadd.f32 %v1305, %v1344
    %v1346 = vpop.f32.mrb[0].mxu0
    %v1347 = vpop.f32.mrb[0].mxu0
    %v1348 = vpop.f32.mrb[0].mxu0
    %1349 = vdwg.mxu0
    %1350 = vst [vmem:[#allocation10] sm:$0xff] %v1345
    // Predicated region
    $region46: #{tpu_custom_call.1} parent=1 // pred_check
      _
    $region47: #{tpu_custom_call.1} parent=1 // pred_check_branch
      %1352 = sbr.rel (0) target = $region49
    $region48: #{tpu_custom_call.1} parent=1 // pred_region
      %s1354 = ssub.s32 128, 128
      %1355 = vsyncadd [#allocation4], %s1354
      %s1357 = sshll.u32 [#allocation10], 4
      %s1358 = int_to_ptr.vmem [resolvable:$true] %s1357
      %1360 = dma.vmem_to_hbm [thread:$0]  %s1358, 128, %s7, [#allocation4]
    $region49: #{tpu_custom_call.1} parent=1 // pred_fallthru
      _
    // Predicated region
    $region50: #{tpu_custom_call.1} parent=1 // pred_check
      _
    $region51: #{tpu_custom_call.1} parent=1 // pred_check_branch
      %1362 = sbr.rel (0) target = $region53
    $region52: #{tpu_custom_call.1} parent=1 // pred_region
      %1363 = dma.done [#allocation4], 128
    $region53: #{tpu_custom_call.1} parent=1 // pred_fallthru
      _
    %1364 = vsyncpa [#allocation3], 1
    %1365 = vsyncpa [#allocation6], 1
    %1366 = vsyncpa [#allocation9], 1
    %1367 = vsyncpa [#allocation4], 1

</llo_original>
